<compile_context>
chip_gen: v6e
topology: v6e:2x2x1
jax: 0.10.0
libtpu: 0.0.40
codegen_flags: <defaults>
</compile_context>

<pallas_src>
import functools

import jax
import jax.numpy as jnp
from jax.experimental import pallas as pl
from jax.experimental.pallas import tpu as pltpu

BETA = 5.0
SOFTPLUS_THRESHOLD = 20.0     # PyTorch nn.Softplus default threshold (applied to beta*x)
ROWS_PER_SLAB = 8             # batch rows packed per lane-dense slab row
_MAX_TILE_SLAB_ROWS = 2048    # hard cap: ~<=20 MiB VMEM/step, safe on v7x's 64 MiB
_MIN_SPLIT_SLAB_ROWS = 256    # only force a >=2-step grid if each step gets >= this


def _fcn_kernel(x_ref, w1_ref, b1_ref, w2_ref, b2_ref, o_ref, *, act_dtype):
    # fc1 on the MXU: bf16 operands, f32 accumulation. The f32->bf16 cast of the
    # streamed x happens HERE (free VPU filler) instead of as a separate XLA
    # pass over HBM in the wrapper.
    x = x_ref[...].astype(jnp.bfloat16)
    h = jnp.dot(x, w1_ref[...], preferred_element_type=jnp.float32)
    h = h + b1_ref[...]

    # Softplus(beta=5): (1/beta) * log1p(exp(beta*h)), linear where beta*h > threshold.
    # act_dtype is bf16 on v6e/v7x (2 elems/lane -> halves VPU/EUP time) and
    # f32 on v5e/older (no bf16 VPU/EUP there).
    hd = h.astype(act_dtype)
    beta = jnp.asarray(BETA, act_dtype)
    inv_beta = jnp.asarray(1.0 / BETA, act_dtype)
    thr = jnp.asarray(SOFTPLUS_THRESHOLD, act_dtype)
    z = beta * hd
    z_safe = jnp.minimum(z, thr)            # clamp untaken exp branch (no overflow)
    sp = jnp.where(z > thr, hd, jnp.log1p(jnp.exp(z_safe)) * inv_beta)

    # fc2 on the MXU: bf16 operands, f32 accumulation.
    y = jnp.dot(sp.astype(w2_ref.dtype), w2_ref[...],
                preferred_element_type=jnp.float32)
    o_ref[...] = (y + b2_ref[...]).astype(o_ref.dtype)


def prepare_fcn_params(w1, b1, w2, b2):
    """Per-parameter-set preprocessing. Hoist / cache this out of the hot path.

    Promotes W1/W2 to block-diagonal kron(I_R, W) and tiles the biases so the
    whole forward stays lane-dense with no in-kernel relayout.
    """
    R = ROWS_PER_SLAB
    eye_r = jnp.eye(R, dtype=jnp.float32)
    w1_bd = jnp.kron(eye_r, w1.astype(jnp.float32)).astype(jnp.bfloat16)  # (R*in,    R*width)
    w2_bd = jnp.kron(eye_r, w2.astype(jnp.float32)).astype(jnp.bfloat16)  # (R*width, R*out)
    b1_t = jnp.tile(b1.reshape(1, -1).astype(jnp.float32), (1, R))        # (1, R*width)
    b2_t = jnp.tile(b2.reshape(1, -1).astype(jnp.float32), (1, R))        # (1, R*out)
    return w1_bd, b1_t, w2_bd, b2_t


def _default_act_dtype():
    # bf16 elementwise math only pays off where the VPU/EUP support it natively.
    try:
        kind = jax.devices()[0].device_kind.lower()
    except Exception:
        kind = ""
    if "v6" in kind or "v7" in kind:
        return jnp.bfloat16
    return jnp.float32            # v5e/v5p/v4/unknown: keep softplus math in f32


def simple_fcn(x, w1, b1, w2, b2, *, prepared_params=None,
               max_tile_rows=8192, out_dtype=jnp.float32, act_dtype=None):
    """x: (B, input_size); w1: (in, width); b1: (width,); w2: (width, out);
       b2: (out,). Returns (B, out) in out_dtype (f32 default; bf16 halves the
       writeback traffic if downstream tolerates it)."""
    B, input_size = x.shape
    out_size = w2.shape[1]
    R = ROWS_PER_SLAB

    if act_dtype is None:
        act_dtype = _default_act_dtype()
    if prepared_params is None:
        prepared_params = prepare_fcn_params(w1, b1, w2, b2)
    w1_bd, b1_t, w2_bd, b2_t = prepared_params

    # Pad batch to a multiple of R (only when actually needed) so the row-major
    # (B, out) <-> (B/R, R*out) slab packing is exact.
    b_pad = -(-B // R) * R
    if b_pad != B:
        x = jnp.pad(x, ((0, b_pad - B), (0, 0)))
    num_slab_rows = b_pad // R

    # Lane-dense slab: pack R consecutive batch rows into one row (row-major
    # reshape, free in XLA). x keeps its input dtype; bf16 cast is in-kernel.
    x_slab = x.reshape(num_slab_rows, R * input_size)

    # Batch tile (in slab rows): as large as the budget allows so each grid step
    # moves >~1 MiB of HBM traffic (per-step overhead ~0.35 us otherwise dominates).
    max_tile_p = max(8, min(max_tile_rows // R, _MAX_TILE_SLAB_ROWS) // 8 * 8)
    if num_slab_rows > max_tile_p:
        tile_p = max_tile_p
    else:
        tile_p = num_slab_rows
        if num_slab_rows >= 2 * _MIN_SPLIT_SLAB_ROWS:
            # v7x: a single-step grid cannot be sharded across the two TCs;
            # split large-but-single-tile batches into 2 grid steps.
            half = (num_slab_rows + 1) // 2
            tile_p = ((half + 7) // 8) * 8
    grid = (pl.cdiv(num_slab_rows, tile_p),)

    kernel = functools.partial(_fcn_kernel, act_dtype=act_dtype)

    out_slab = pl.pallas_call(
        kernel,
        out_shape=jax.ShapeDtypeStruct((num_slab_rows, R * out_size), out_dtype),
        grid=grid,
        in_specs=[
            # x tile: streamed over the batch grid (double-buffered by Pallas).
            # If an xprof trace still shows exposed x DMA at long grids, add
            # pipeline_mode=pl.Buffered(3) here (costs one extra x buffer).
            pl.BlockSpec((tile_p, R * input_size), lambda i: (i, 0)),
            # Weights/biases: constant block index -> VMEM resident, DMA'd once.
            pl.BlockSpec(w1_bd.shape, lambda i: (0, 0)),
            pl.BlockSpec(b1_t.shape, lambda i: (0, 0)),
            pl.BlockSpec(w2_bd.shape, lambda i: (0, 0)),
            pl.BlockSpec(b2_t.shape, lambda i: (0, 0)),
        ],
        out_specs=pl.BlockSpec((tile_p, R * out_size), lambda i: (i, 0)),
        compiler_params=pltpu.CompilerParams(
            dimension_semantics=("parallel",),   # shard batch tiles across TCs (v7x)
            # At tile_p <= 2048 slab rows: x f32 + y double-buffered plus f32/bf16
            # intermediates plus ~0.4 MiB weights ~<= 20 MiB -> comfortable
            # headroom under 48 MiB on v5e/v6e (128 MiB) and v7x (64 MiB).
            vmem_limit_bytes=48 * 1024 * 1024,
        ),
    )(x_slab, w1_bd, b1_t, w2_bd, b2_t)

    # Unpack slab rows back to (B, out_size) — row-major reshape, free in XLA.
    return out_slab.reshape(b_pad, out_size)[:B]


def _reference_f32(x, w1, b1, w2, b2):
    h = x @ w1 + b1.reshape(1, -1)
    z = BETA * h
    sp = jnp.where(z > SOFTPLUS_THRESHOLD, h,
                   jnp.log1p(jnp.exp(jnp.minimum(z, SOFTPLUS_THRESHOLD))) / BETA)
    return sp @ w2 + b2.reshape(1, -1)


if __name__ == "__main__":
    # Small shapes implied by the module: batch=8, input_size=32, width=64, output_size=16
    B, input_size, width, output_size = 8, 32, 64, 16

    key = jax.random.PRNGKey(0)
    kx, k1, k2, k3, k4 = jax.random.split(key, 5)

    x = jax.random.normal(kx, (B, input_size), dtype=jnp.float32)

    # Deterministic PyTorch-Linear-style init (uniform in +/- 1/sqrt(fan_in)).
    bound1 = 1.0 / (input_size ** 0.5)
    w1 = jax.random.uniform(k1, (input_size, width), jnp.float32, -bound1, bound1)
    b1 = jax.random.uniform(k2, (width,), jnp.float32, -bound1, bound1)
    bound2 = 1.0 / (width ** 0.5)
    w2 = jax.random.uniform(k3, (width, output_size), jnp.float32, -bound2, bound2)
    b2 = jax.random.uniform(k4, (output_size,), jnp.float32, -bound2, bound2)

    # Hoist the per-parameter-set prep out of the hot path (review item).
    params = prepare_fcn_params(w1, b1, w2, b2)

    out = simple_fcn(x, w1, b1, w2, b2, prepared_params=params)
    jax.block_until_ready(out)

    ref = _reference_f32(x, w1, b1, w2, b2)
    assert out.shape == (B, output_size)
    # Tolerance accounts for bf16 MXU operands / bf16 softplus (f32 accumulation).
    assert jnp.allclose(out, ref, atol=5e-2, rtol=5e-2), float(jnp.max(jnp.abs(out - ref)))

    # Second small check: B not a multiple of 8 exercises the pad/unpack path.
    x2 = jax.random.normal(jax.random.PRNGKey(1), (50, input_size), dtype=jnp.float32)
    out2 = simple_fcn(x2, w1, b1, w2, b2, prepared_params=params)
    jax.block_until_ready(out2)
    ref2 = _reference_f32(x2, w1, b1, w2, b2)
    assert out2.shape == (50, output_size)
    assert jnp.allclose(out2, ref2, atol=5e-2, rtol=5e-2), float(jnp.max(jnp.abs(out2 - ref2)))

    print("KERNEL_OK")
</pallas_src>

<mosaic_0001>
module attributes {stable_mosaic.version = 11 : i64} {
  func.func @_fcn_kernel(%arg0: i32, %arg1: memref<1x256xf32, #tpu.memory_space<vmem>>, %arg2: memref<256x512xbf16, #tpu.memory_space<vmem>>, %arg3: memref<1x512xf32, #tpu.memory_space<vmem>>, %arg4: memref<512x128xbf16, #tpu.memory_space<vmem>>, %arg5: memref<1x128xf32, #tpu.memory_space<vmem>>, %arg6: memref<1x128xf32, #tpu.memory_space<vmem>>) attributes {dimension_semantics = [#tpu.dimension_semantics<parallel>], iteration_bounds = array<i64: 1>, scalar_prefetch = 0 : i64, scratch_operands = 0 : i64, tpu.core_type = #tpu.core_type<tc>, window_params = [{transform_indices = @transform_0, window_bounds = array<i64: 1, 256>}, {pipeline_mode = #tpu.pipeline_mode<synchronous>, transform_indices = @transform_1, window_bounds = array<i64: 256, 512>}, {pipeline_mode = #tpu.pipeline_mode<synchronous>, transform_indices = @transform_2, window_bounds = array<i64: 1, 512>}, {pipeline_mode = #tpu.pipeline_mode<synchronous>, transform_indices = @transform_3, window_bounds = array<i64: 512, 128>}, {pipeline_mode = #tpu.pipeline_mode<synchronous>, transform_indices = @transform_4, window_bounds = array<i64: 1, 128>}, {transform_indices = @transform_5, window_bounds = array<i64: 1, 128>}]} {
    %c0 = arith.constant 0 : index
    %c0_0 = arith.constant 0 : index
    %0 = vector.load %arg1[%c0, %c0_0] : memref<1x256xf32, #tpu.memory_space<vmem>>, vector<1x256xf32>
    %1 = arith.truncf %0 : vector<1x256xf32> to vector<1x256xbf16>
    %c0_1 = arith.constant 0 : index
    %c0_2 = arith.constant 0 : index
    %2 = vector.load %arg2[%c0_1, %c0_2] : memref<256x512xbf16, #tpu.memory_space<vmem>>, vector<256x512xbf16>
    %cst = arith.constant dense<0.000000e+00> : vector<1x512xf32>
    %3 = tpu.matmul %1, %2, %cst {dimension_numbers = #tpu.dot_dimension_numbers<[1], [0], [0], [1], [0, 0, 1, 1], [], []>} : vector<1x256xbf16>, vector<256x512xbf16>, vector<1x512xf32> -> vector<1x512xf32>
    %c0_3 = arith.constant 0 : index
    %c0_4 = arith.constant 0 : index
    %4 = vector.load %arg3[%c0_3, %c0_4] : memref<1x512xf32, #tpu.memory_space<vmem>>, vector<1x512xf32>
    %5 = arith.addf %3, %4 : vector<1x512xf32>
    %cst_5 = arith.constant 5.000000e+00 : f32
    %6 = vector.broadcast %cst_5 : f32 to vector<1x512xf32>
    %7 = arith.mulf %6, %5 : vector<1x512xf32>
    %cst_6 = arith.constant 2.000000e+01 : f32
    %8 = vector.broadcast %cst_6 : f32 to vector<1x512xf32>
    %9 = arith.minimumf %7, %8 : vector<1x512xf32>
    %cst_7 = arith.constant 2.000000e+01 : f32
    %10 = vector.broadcast %cst_7 : f32 to vector<1x512xf32>
    %11 = arith.cmpf ogt, %7, %10 : vector<1x512xf32>
    %12 = math.exp %9 : vector<1x512xf32>
    %13 = math.log1p %12 : vector<1x512xf32>
    %cst_8 = arith.constant 2.000000e-01 : f32
    %14 = vector.broadcast %cst_8 : f32 to vector<1x512xf32>
    %15 = arith.mulf %13, %14 : vector<1x512xf32>
    %16 = arith.select %11, %5, %15 : vector<1x512xi1>, vector<1x512xf32>
    %17 = arith.truncf %16 : vector<1x512xf32> to vector<1x512xbf16>
    %c0_9 = arith.constant 0 : index
    %c0_10 = arith.constant 0 : index
    %18 = vector.load %arg4[%c0_9, %c0_10] : memref<512x128xbf16, #tpu.memory_space<vmem>>, vector<512x128xbf16>
    %cst_11 = arith.constant dense<0.000000e+00> : vector<1x128xf32>
    %19 = tpu.matmul %17, %18, %cst_11 {dimension_numbers = #tpu.dot_dimension_numbers<[1], [0], [0], [1], [0, 0, 1, 1], [], []>} : vector<1x512xbf16>, vector<512x128xbf16>, vector<1x128xf32> -> vector<1x128xf32>
    %c0_12 = arith.constant 0 : index
    %c0_13 = arith.constant 0 : index
    %20 = vector.load %arg5[%c0_12, %c0_13] : memref<1x128xf32, #tpu.memory_space<vmem>>, vector<1x128xf32>
    %21 = arith.addf %19, %20 : vector<1x128xf32>
    %c0_14 = arith.constant 0 : index
    %c0_15 = arith.constant 0 : index
    %22 = vector.load %arg6[%c0_14, %c0_15] : memref<1x128xf32, #tpu.memory_space<vmem>>, vector<1x128xf32>
    tpu.vector_store %arg6[%c0_14, %c0_15], %21 {strides = array<i32>} : memref<1x128xf32, #tpu.memory_space<vmem>>, vector<1x128xf32>,
    return
  }
  func.func @transform_0(%arg0: i32) -> (i32, i32) {
    %c0_i32 = arith.constant 0 : i32
    %c0_i32_0 = arith.constant 0 : i32
    return %arg0, %c0_i32 : i32, i32
  }
  func.func @transform_1(%arg0: i32) -> (i32, i32) {
    %c0_i32 = arith.constant 0 : i32
    %c0_i32_0 = arith.constant 0 : i32
    %c0_i32_1 = arith.constant 0 : i32
    return %c0_i32, %c0_i32_0 : i32, i32
  }
  func.func @transform_2(%arg0: i32) -> (i32, i32) {
    %c0_i32 = arith.constant 0 : i32
    %c0_i32_0 = arith.constant 0 : i32
    %c0_i32_1 = arith.constant 0 : i32
    return %c0_i32, %c0_i32_0 : i32, i32
  }
  func.func @transform_3(%arg0: i32) -> (i32, i32) {
    %c0_i32 = arith.constant 0 : i32
    %c0_i32_0 = arith.constant 0 : i32
    %c0_i32_1 = arith.constant 0 : i32
    return %c0_i32, %c0_i32_0 : i32, i32
  }
  func.func @transform_4(%arg0: i32) -> (i32, i32) {
    %c0_i32 = arith.constant 0 : i32
    %c0_i32_0 = arith.constant 0 : i32
    %c0_i32_1 = arith.constant 0 : i32
    return %c0_i32, %c0_i32_0 : i32, i32
  }
  func.func @transform_5(%arg0: i32) -> (i32, i32) {
    %c0_i32 = arith.constant 0 : i32
    %c0_i32_0 = arith.constant 0 : i32
    return %arg0, %c0_i32 : i32, i32
  }
}

</mosaic_0001>

<llo_original>
// kernel: tpu_custom_call.1
$region0: #{tpu_custom_call.1}
  #allocation0 [shape = 'u32[]', space=smem, size = 0x4, offset = 0x4, fixed_abs, tag = 'smem constant byte address 0x4 - core index']
  #allocation1 [shape = 'u32[144,128]{1,0:T(1,128)}', space=vmem, size = 0x12000, scoped, tag = 'internal scratch']
  %s0 = inlined_call_operand.hbm [shape: f32[1,256], index: 0, kind: input, shape index: {}]
  %s1 = inlined_call_operand.hbm [shape: bf16[256,512], index: 1, kind: input, shape index: {}]
  %s2 = inlined_call_operand.hbm [shape: f32[1,512], index: 2, kind: input, shape index: {}]
  %s3 = inlined_call_operand.hbm [shape: bf16[512,128], index: 3, kind: input, shape index: {}]
  %s4 = inlined_call_operand.vmem [shape: f32[1,128], index: 4, kind: input, shape index: {}]
  %s5 = inlined_call_operand.hbm [shape: f32[1,128], index: 5, kind: output, shape index: {}]
  %s6 = sld [smem:[#allocation0]]
  $region46: #{tpu_custom_call.1} parent=0
    _
  %s8 = ssub.s32 1, %s6
  %s9 = scalar_select 0, %s8, %s6
  $region1: #{tpu_custom_call.1} parent=0
    #allocation2 [shape = 'u8[1024]{0}', space=vmem, size = 0x400, scoped, tag = 'input window, operand 0, single buffered']
    #allocation3 [shape = 's32[1]{0}', space=sflag, size = 0x4, scoped, tag = 'scoped memory for tpu_custom_call.1']
    #allocation4 [shape = 's32[1]{0}', space=sflag, size = 0x4, scoped, tag = 'scoped memory for tpu_custom_call.1']
    #allocation5 [shape = 'u8[262144]{0}', space=vmem, size = 0x40000, scoped, tag = 'input window, operand 1, single buffered']
    #allocation6 [shape = 's32[1]{0}', space=sflag, size = 0x4, scoped, tag = 'scoped memory for tpu_custom_call.1']
    #allocation7 [shape = 'u8[2048]{0}', space=vmem, size = 0x800, scoped, tag = 'input window, operand 2, single buffered']
    #allocation8 [shape = 'u8[131072]{0}', space=vmem, size = 0x20000, scoped, tag = 'input window, operand 3, single buffered']
    #allocation9 [shape = 's32[1]{0}', space=sflag, size = 0x4, scoped, tag = 'scoped memory for tpu_custom_call.1']
    #allocation10 [shape = 'u8[512]{0}', space=vmem, size = 0x400, scoped, tag = 'output window, operand 0, single buffered']
    %10 = vsyncpa [#allocation3], 0
    %11 = vsyncpa [#allocation6], 0
    %12 = vsyncpa [#allocation9], 0
    %13 = vsyncpa [#allocation4], 0
    // Predicated region
    $region2: #{tpu_custom_call.1} parent=1 // pred_check
      _
    $region3: #{tpu_custom_call.1} parent=1 // pred_check_branch
      %15 = sbr.rel (0) target = $region5
    $region4: #{tpu_custom_call.1} parent=1 // pred_region
      %s17 = ssub.s32 32, 32
      %18 = vsyncadd [#allocation3], %s17
      %s20 = sshll.u32 [#allocation2], 4
      %s21 = int_to_ptr.vmem [resolvable:$true] %s20
      %23 = dma.hbm_to_vmem [thread:$0]  %s0, 32, %s21, [#allocation3]
    $region5: #{tpu_custom_call.1} parent=1 // pred_fallthru
      _
    // Predicated region
    $region6: #{tpu_custom_call.1} parent=1 // pred_check
      _
    $region7: #{tpu_custom_call.1} parent=1 // pred_check_branch
      %25 = sbr.rel (0) target = $region9
    $region8: #{tpu_custom_call.1} parent=1 // pred_region
      %s27 = ssub.s32 8192, 8192
      %28 = vsyncadd [#allocation6], %s27
      %s29 = sshll.u32 [#allocation5], 4
      %s30 = int_to_ptr.vmem [resolvable:$true] %s29
      %35 = dma.hbm_to_vmem [thread:$0]  %s1, 8192, %s30, [#allocation6], 256, 256, 16
    $region9: #{tpu_custom_call.1} parent=1 // pred_fallthru
      _
    // Predicated region
    $region10: #{tpu_custom_call.1} parent=1 // pred_check
      _
    $region11: #{tpu_custom_call.1} parent=1 // pred_check_branch
      %37 = sbr.rel (0) target = $region13
    $region12: #{tpu_custom_call.1} parent=1 // pred_region
      %s39 = ssub.s32 64, 64
      %40 = vsyncadd [#allocation6], %s39
      %s42 = sshll.u32 [#allocation7], 4
      %s43 = int_to_ptr.vmem [resolvable:$true] %s42
      %45 = dma.hbm_to_vmem [thread:$0]  %s2, 64, %s43, [#allocation6]
    $region13: #{tpu_custom_call.1} parent=1 // pred_fallthru
      _
    // Predicated region
    $region14: #{tpu_custom_call.1} parent=1 // pred_check
      _
    $region15: #{tpu_custom_call.1} parent=1 // pred_check_branch
      %47 = sbr.rel (0) target = $region17
    $region16: #{tpu_custom_call.1} parent=1 // pred_region
      %s49 = ssub.s32 4096, 4096
      %50 = vsyncadd [#allocation9], %s49
      %s51 = sshll.u32 [#allocation8], 4
      %s52 = int_to_ptr.vmem [resolvable:$true] %s51
      %57 = dma.hbm_to_vmem [thread:$0]  %s3, 4096, %s52, [#allocation9], 64, 64, 4
    $region17: #{tpu_custom_call.1} parent=1 // pred_fallthru
      _
    // Predicated region
    $region18: #{tpu_custom_call.1} parent=1 // pred_check
      _
    $region19: #{tpu_custom_call.1} parent=1 // pred_check_branch
      %59 = sbr.rel (0) target = $region21
    $region20: #{tpu_custom_call.1} parent=1 // pred_region
      _
    $region21: #{tpu_custom_call.1} parent=1 // pred_fallthru
      _
    // Predicated region
    $region22: #{tpu_custom_call.1} parent=1 // pred_check
      _
    $region23: #{tpu_custom_call.1} parent=1 // pred_check_branch
      %61 = sbr.rel (0) target = $region25
    $region24: #{tpu_custom_call.1} parent=1 // pred_region
      %62 = dma.done [#allocation3], 32
    $region25: #{tpu_custom_call.1} parent=1 // pred_fallthru
      _
    // Predicated region
    $region26: #{tpu_custom_call.1} parent=1 // pred_check
      _
    $region27: #{tpu_custom_call.1} parent=1 // pred_check_branch
      %64 = sbr.rel (0) target = $region29
    $region28: #{tpu_custom_call.1} parent=1 // pred_region
      %65 = dma.done [#allocation6], 8192
    $region29: #{tpu_custom_call.1} parent=1 // pred_fallthru
      _
    // Predicated region
    $region30: #{tpu_custom_call.1} parent=1 // pred_check
      _
    $region31: #{tpu_custom_call.1} parent=1 // pred_check_branch
      %67 = sbr.rel (0) target = $region33
    $region32: #{tpu_custom_call.1} parent=1 // pred_region
      %68 = dma.done [#allocation6], 64
    $region33: #{tpu_custom_call.1} parent=1 // pred_fallthru
      _
    // Predicated region
    $region34: #{tpu_custom_call.1} parent=1 // pred_check
      _
    $region35: #{tpu_custom_call.1} parent=1 // pred_check_branch
      %70 = sbr.rel (0) target = $region37
    $region36: #{tpu_custom_call.1} parent=1 // pred_region
      %71 = dma.done [#allocation9], 4096
    $region37: #{tpu_custom_call.1} parent=1 // pred_fallthru
      _
    %v73 = vld [vmem:[#allocation2] sm:$0x3]
    %v75 = vlaneseq
    %v76 = vshrl.u32 %v75, 7
    %v77 = vsub.s32 0, %v76
    %v78 = vrot.slane %v73, %v77
    %v79 = vlaneseq
    %v80 = vshrl.u32 %v79, 7
    %v81 = vsub.s32 1, %v80
    %v82 = vrot.slane %v73, %v81
    %v85 = vpack.c.bf16 %v78, %v78
    %v86 = vpack.c.bf16 %v82, %v82
    %v87 = vld [vmem:[#allocation5] sm:$0xff]
    %v88 = vld [vmem:[#allocation5 + $0x8] sm:$0xff]
    %v89 = vld [vmem:[#allocation5 + $0x10] sm:$0xff]
    %v90 = vld [vmem:[#allocation5 + $0x18] sm:$0xff]
    %v91 = vld [vmem:[#allocation5 + $0x20] sm:$0xff]
    %v92 = vld [vmem:[#allocation5 + $0x28] sm:$0xff]
    %v93 = vld [vmem:[#allocation5 + $0x30] sm:$0xff]
    %v94 = vld [vmem:[#allocation5 + $0x38] sm:$0xff]
    %v95 = vld [vmem:[#allocation5 + $0x40] sm:$0xff]
    %v96 = vld [vmem:[#allocation5 + $0x48] sm:$0xff]
    %v97 = vld [vmem:[#allocation5 + $0x50] sm:$0xff]
    %v98 = vld [vmem:[#allocation5 + $0x58] sm:$0xff]
    %v99 = vld [vmem:[#allocation5 + $0x60] sm:$0xff]
    %v100 = vld [vmem:[#allocation5 + $0x68] sm:$0xff]
    %v101 = vld [vmem:[#allocation5 + $0x70] sm:$0xff]
    %v102 = vld [vmem:[#allocation5 + $0x78] sm:$0xff]
    %v103 = vld [vmem:[#allocation5 + $0x80] sm:$0xff]
    %v104 = vld [vmem:[#allocation5 + $0x88] sm:$0xff]
    %v105 = vld [vmem:[#allocation5 + $0x90] sm:$0xff]
    %v106 = vld [vmem:[#allocation5 + $0x98] sm:$0xff]
    %v107 = vld [vmem:[#allocation5 + $0xa0] sm:$0xff]
    %v108 = vld [vmem:[#allocation5 + $0xa8] sm:$0xff]
    %v109 = vld [vmem:[#allocation5 + $0xb0] sm:$0xff]
    %v110 = vld [vmem:[#allocation5 + $0xb8] sm:$0xff]
    %v111 = vld [vmem:[#allocation5 + $0xc0] sm:$0xff]
    %v112 = vld [vmem:[#allocation5 + $0xc8] sm:$0xff]
    %v113 = vld [vmem:[#allocation5 + $0xd0] sm:$0xff]
    %v114 = vld [vmem:[#allocation5 + $0xd8] sm:$0xff]
    %v115 = vld [vmem:[#allocation5 + $0xe0] sm:$0xff]
    %v116 = vld [vmem:[#allocation5 + $0xe8] sm:$0xff]
    %v117 = vld [vmem:[#allocation5 + $0xf0] sm:$0xff]
    %v118 = vld [vmem:[#allocation5 + $0xf8] sm:$0xff]
    %v119 = vld [vmem:[#allocation5 + $0x100] sm:$0xff]
    %v120 = vld [vmem:[#allocation5 + $0x108] sm:$0xff]
    %v121 = vld [vmem:[#allocation5 + $0x110] sm:$0xff]
    %v122 = vld [vmem:[#allocation5 + $0x118] sm:$0xff]
    %v123 = vld [vmem:[#allocation5 + $0x120] sm:$0xff]
    %v124 = vld [vmem:[#allocation5 + $0x128] sm:$0xff]
    %v125 = vld [vmem:[#allocation5 + $0x130] sm:$0xff]
    %v126 = vld [vmem:[#allocation5 + $0x138] sm:$0xff]
    %v127 = vld [vmem:[#allocation5 + $0x140] sm:$0xff]
    %v128 = vld [vmem:[#allocation5 + $0x148] sm:$0xff]
    %v129 = vld [vmem:[#allocation5 + $0x150] sm:$0xff]
    %v130 = vld [vmem:[#allocation5 + $0x158] sm:$0xff]
    %v131 = vld [vmem:[#allocation5 + $0x160] sm:$0xff]
    %v132 = vld [vmem:[#allocation5 + $0x168] sm:$0xff]
    %v133 = vld [vmem:[#allocation5 + $0x170] sm:$0xff]
    %v134 = vld [vmem:[#allocation5 + $0x178] sm:$0xff]
    %v135 = vld [vmem:[#allocation5 + $0x180] sm:$0xff]
    %v136 = vld [vmem:[#allocation5 + $0x188] sm:$0xff]
    %v137 = vld [vmem:[#allocation5 + $0x190] sm:$0xff]
    %v138 = vld [vmem:[#allocation5 + $0x198] sm:$0xff]
    %v139 = vld [vmem:[#allocation5 + $0x1a0] sm:$0xff]
    %v140 = vld [vmem:[#allocation5 + $0x1a8] sm:$0xff]
    %v141 = vld [vmem:[#allocation5 + $0x1b0] sm:$0xff]
    %v142 = vld [vmem:[#allocation5 + $0x1b8] sm:$0xff]
    %v143 = vld [vmem:[#allocation5 + $0x1c0] sm:$0xff]
    %v144 = vld [vmem:[#allocation5 + $0x1c8] sm:$0xff]
    %v145 = vld [vmem:[#allocation5 + $0x1d0] sm:$0xff]
    %v146 = vld [vmem:[#allocation5 + $0x1d8] sm:$0xff]
    %v147 = vld [vmem:[#allocation5 + $0x1e0] sm:$0xff]
    %v148 = vld [vmem:[#allocation5 + $0x1e8] sm:$0xff]
    %v149 = vld [vmem:[#allocation5 + $0x1f0] sm:$0xff]
    %v150 = vld [vmem:[#allocation5 + $0x1f8] sm:$0xff]
    %v151 = vld [vmem:[#allocation7] sm:$0xf]
    %v216 = vunpack.c.l.b16 %v87
    %v217 = vunpack.c.h.b16 %v87
    %v218 = vunpack.c.l.b16 %v88
    %v219 = vunpack.c.h.b16 %v88
    %v220 = vunpack.c.l.b16 %v89
    %v221 = vunpack.c.h.b16 %v89
    %v222 = vunpack.c.l.b16 %v90
    %v223 = vunpack.c.h.b16 %v90
    %v224 = vunpack.c.l.b16 %v91
    %v225 = vunpack.c.h.b16 %v91
    %v226 = vunpack.c.l.b16 %v92
    %v227 = vunpack.c.h.b16 %v92
    %v228 = vunpack.c.l.b16 %v93
    %v229 = vunpack.c.h.b16 %v93
    %v230 = vunpack.c.l.b16 %v94
    %v231 = vunpack.c.h.b16 %v94
    %v232 = vunpack.c.l.b16 %v95
    %v233 = vunpack.c.h.b16 %v95
    %v234 = vunpack.c.l.b16 %v96
    %v235 = vunpack.c.h.b16 %v96
    %v236 = vunpack.c.l.b16 %v97
    %v237 = vunpack.c.h.b16 %v97
    %v238 = vunpack.c.l.b16 %v98
    %v239 = vunpack.c.h.b16 %v98
    %v240 = vunpack.c.l.b16 %v99
    %v241 = vunpack.c.h.b16 %v99
    %v242 = vunpack.c.l.b16 %v100
    %v243 = vunpack.c.h.b16 %v100
    %v244 = vunpack.c.l.b16 %v101
    %v245 = vunpack.c.h.b16 %v101
    %v246 = vunpack.c.l.b16 %v102
    %v247 = vunpack.c.h.b16 %v102
    %v248 = vunpack.c.l.b16 %v103
    %v249 = vunpack.c.h.b16 %v103
    %v250 = vunpack.c.l.b16 %v104
    %v251 = vunpack.c.h.b16 %v104
    %v252 = vunpack.c.l.b16 %v105
    %v253 = vunpack.c.h.b16 %v105
    %v254 = vunpack.c.l.b16 %v106
    %v255 = vunpack.c.h.b16 %v106
    %v256 = vunpack.c.l.b16 %v107
    %v257 = vunpack.c.h.b16 %v107
    %v258 = vunpack.c.l.b16 %v108
    %v259 = vunpack.c.h.b16 %v108
    %v260 = vunpack.c.l.b16 %v109
    %v261 = vunpack.c.h.b16 %v109
    %v262 = vunpack.c.l.b16 %v110
    %v263 = vunpack.c.h.b16 %v110
    %v264 = vunpack.c.l.b16 %v111
    %v265 = vunpack.c.h.b16 %v111
    %v266 = vunpack.c.l.b16 %v112
    %v267 = vunpack.c.h.b16 %v112
    %v268 = vunpack.c.l.b16 %v113
    %v269 = vunpack.c.h.b16 %v113
    %v270 = vunpack.c.l.b16 %v114
    %v271 = vunpack.c.h.b16 %v114
    %v272 = vunpack.c.l.b16 %v115
    %v273 = vunpack.c.h.b16 %v115
    %v274 = vunpack.c.l.b16 %v116
    %v275 = vunpack.c.h.b16 %v116
    %v276 = vunpack.c.l.b16 %v117
    %v277 = vunpack.c.h.b16 %v117
    %v278 = vunpack.c.l.b16 %v118
    %v279 = vunpack.c.h.b16 %v118
    %v280 = vunpack.c.l.b16 %v119
    %v281 = vunpack.c.h.b16 %v119
    %v282 = vunpack.c.l.b16 %v120
    %v283 = vunpack.c.h.b16 %v120
    %v284 = vunpack.c.l.b16 %v121
    %v285 = vunpack.c.h.b16 %v121
    %v286 = vunpack.c.l.b16 %v122
    %v287 = vunpack.c.h.b16 %v122
    %v288 = vunpack.c.l.b16 %v123
    %v289 = vunpack.c.h.b16 %v123
    %v290 = vunpack.c.l.b16 %v124
    %v291 = vunpack.c.h.b16 %v124
    %v292 = vunpack.c.l.b16 %v125
    %v293 = vunpack.c.h.b16 %v125
    %v294 = vunpack.c.l.b16 %v126
    %v295 = vunpack.c.h.b16 %v126
    %v296 = vunpack.c.l.b16 %v127
    %v297 = vunpack.c.h.b16 %v127
    %v298 = vunpack.c.l.b16 %v128
    %v299 = vunpack.c.h.b16 %v128
    %v300 = vunpack.c.l.b16 %v129
    %v301 = vunpack.c.h.b16 %v129
    %v302 = vunpack.c.l.b16 %v130
    %v303 = vunpack.c.h.b16 %v130
    %v304 = vunpack.c.l.b16 %v131
    %v305 = vunpack.c.h.b16 %v131
    %v306 = vunpack.c.l.b16 %v132
    %v307 = vunpack.c.h.b16 %v132
    %v308 = vunpack.c.l.b16 %v133
    %v309 = vunpack.c.h.b16 %v133
    %v310 = vunpack.c.l.b16 %v134
    %v311 = vunpack.c.h.b16 %v134
    %v312 = vunpack.c.l.b16 %v135
    %v313 = vunpack.c.h.b16 %v135
    %v314 = vunpack.c.l.b16 %v136
    %v315 = vunpack.c.h.b16 %v136
    %v316 = vunpack.c.l.b16 %v137
    %v317 = vunpack.c.h.b16 %v137
    %v318 = vunpack.c.l.b16 %v138
    %v319 = vunpack.c.h.b16 %v138
    %v320 = vunpack.c.l.b16 %v139
    %v321 = vunpack.c.h.b16 %v139
    %v322 = vunpack.c.l.b16 %v140
    %v323 = vunpack.c.h.b16 %v140
    %v324 = vunpack.c.l.b16 %v141
    %v325 = vunpack.c.h.b16 %v141
    %v326 = vunpack.c.l.b16 %v142
    %v327 = vunpack.c.h.b16 %v142
    %v328 = vunpack.c.l.b16 %v143
    %v329 = vunpack.c.h.b16 %v143
    %v330 = vunpack.c.l.b16 %v144
    %v331 = vunpack.c.h.b16 %v144
    %v332 = vunpack.c.l.b16 %v145
    %v333 = vunpack.c.h.b16 %v145
    %v334 = vunpack.c.l.b16 %v146
    %v335 = vunpack.c.h.b16 %v146
    %v336 = vunpack.c.l.b16 %v147
    %v337 = vunpack.c.h.b16 %v147
    %v338 = vunpack.c.l.b16 %v148
    %v339 = vunpack.c.h.b16 %v148
    %v340 = vunpack.c.l.b16 %v149
    %v341 = vunpack.c.h.b16 %v149
    %v342 = vunpack.c.l.b16 %v150
    %v343 = vunpack.c.h.b16 %v150
    %v344 = vpack.c.b16 %v220, %v216
    %v345 = vpack.c.b16 %v221, %v217
    %v346 = vpack.c.b16 %v222, %v218
    %v347 = vpack.c.b16 %v223, %v219
    %v348 = vpack.c.b16 %v228, %v224
    %v349 = vpack.c.b16 %v229, %v225
    %v350 = vpack.c.b16 %v230, %v226
    %v351 = vpack.c.b16 %v231, %v227
    %v352 = vpack.c.b16 %v236, %v232
    %v353 = vpack.c.b16 %v237, %v233
    %v354 = vpack.c.b16 %v238, %v234
    %v355 = vpack.c.b16 %v239, %v235
    %v356 = vpack.c.b16 %v244, %v240
    %v357 = vpack.c.b16 %v245, %v241
    %v358 = vpack.c.b16 %v246, %v242
    %v359 = vpack.c.b16 %v247, %v243
    %v360 = vpack.c.b16 %v252, %v248
    %v361 = vpack.c.b16 %v253, %v249
    %v362 = vpack.c.b16 %v254, %v250
    %v363 = vpack.c.b16 %v255, %v251
    %v364 = vpack.c.b16 %v260, %v256
    %v365 = vpack.c.b16 %v261, %v257
    %v366 = vpack.c.b16 %v262, %v258
    %v367 = vpack.c.b16 %v263, %v259
    %v368 = vpack.c.b16 %v268, %v264
    %v369 = vpack.c.b16 %v269, %v265
    %v370 = vpack.c.b16 %v270, %v266
    %v371 = vpack.c.b16 %v271, %v267
    %v372 = vpack.c.b16 %v276, %v272
    %v373 = vpack.c.b16 %v277, %v273
    %v374 = vpack.c.b16 %v278, %v274
    %v375 = vpack.c.b16 %v279, %v275
    %v376 = vpack.c.b16 %v284, %v280
    %v377 = vpack.c.b16 %v285, %v281
    %v378 = vpack.c.b16 %v286, %v282
    %v379 = vpack.c.b16 %v287, %v283
    %v380 = vpack.c.b16 %v292, %v288
    %v381 = vpack.c.b16 %v293, %v289
    %v382 = vpack.c.b16 %v294, %v290
    %v383 = vpack.c.b16 %v295, %v291
    %v384 = vpack.c.b16 %v300, %v296
    %v385 = vpack.c.b16 %v301, %v297
    %v386 = vpack.c.b16 %v302, %v298
    %v387 = vpack.c.b16 %v303, %v299
    %v388 = vpack.c.b16 %v308, %v304
    %v389 = vpack.c.b16 %v309, %v305
    %v390 = vpack.c.b16 %v310, %v306
    %v391 = vpack.c.b16 %v311, %v307
    %v392 = vpack.c.b16 %v316, %v312
    %v393 = vpack.c.b16 %v317, %v313
    %v394 = vpack.c.b16 %v318, %v314
    %v395 = vpack.c.b16 %v319, %v315
    %v396 = vpack.c.b16 %v324, %v320
    %v397 = vpack.c.b16 %v325, %v321
    %v398 = vpack.c.b16 %v326, %v322
    %v399 = vpack.c.b16 %v327, %v323
    %v400 = vpack.c.b16 %v332, %v328
    %v401 = vpack.c.b16 %v333, %v329
    %v402 = vpack.c.b16 %v334, %v330
    %v403 = vpack.c.b16 %v335, %v331
    %v404 = vpack.c.b16 %v340, %v336
    %v405 = vpack.c.b16 %v341, %v337
    %v406 = vpack.c.b16 %v342, %v338
    %v407 = vpack.c.b16 %v343, %v339
    %v473 = vlaneseq
    %v474 = vshrl.u32 %v473, 7
    %v475 = vsub.s32 0, %v474
    %v476 = vrot.slane %v151, %v475
    %v477 = vlaneseq
    %v478 = vshrl.u32 %v477, 7
    %v479 = vsub.s32 1, %v478
    %v480 = vrot.slane %v151, %v479
    %v481 = vlaneseq
    %v482 = vshrl.u32 %v481, 7
    %v483 = vsub.s32 2, %v482
    %v484 = vrot.slane %v151, %v483
    %v485 = vlaneseq
    %v486 = vshrl.u32 %v485, 7
    %v487 = vsub.s32 3, %v486
    %v488 = vrot.slane %v151, %v487
    %493 = vmatprep.subr.bf16.mxu0 %v373
    %494 = vmatpush1.bf16.msra.mxu0 %v372
    %495 = vmatprep.subr.bf16.mxu0 %v369
    %496 = vmatpush1.bf16.msra.mxu0 %v368
    %497 = vmatprep.subr.bf16.mxu0 %v365
    %498 = vmatpush1.bf16.msra.mxu0 %v364
    %499 = vmatprep.subr.bf16.mxu0 %v361
    %500 = vmatpush1.bf16.msra.mxu0 %v360
    %501 = vmatprep.subr.bf16.mxu0 %v357
    %502 = vmatpush1.bf16.msra.mxu0 %v356
    %503 = vmatprep.subr.bf16.mxu0 %v353
    %504 = vmatpush1.bf16.msra.mxu0 %v352
    %505 = vmatprep.subr.bf16.mxu0 %v349
    %506 = vmatpush1.bf16.msra.mxu0 %v348
    %507 = vmatprep.subr.bf16.mxu0 %v345
    %508 = vmatpush1.bf16.msra.mxu0 %v344
    %509 = vmatprep.subr.bf16.mxu0 %v405
    %510 = vmatpush2.bf16.msra.mxu0 %v404
    %511 = vmatprep.subr.bf16.mxu0 %v401
    %512 = vmatpush2.bf16.msra.mxu0 %v400
    %513 = vmatprep.subr.bf16.mxu0 %v397
    %514 = vmatpush2.bf16.msra.mxu0 %v396
    %515 = vmatprep.subr.bf16.mxu0 %v393
    %516 = vmatpush2.bf16.msra.mxu0 %v392
    %517 = vmatprep.subr.bf16.mxu0 %v389
    %518 = vmatpush2.bf16.msra.mxu0 %v388
    %519 = vmatprep.subr.bf16.mxu0 %v385
    %520 = vmatpush2.bf16.msra.mxu0 %v384
    %521 = vmatprep.subr.bf16.mxu0 %v381
    %522 = vmatpush2.bf16.msra.mxu0 %v380
    %523 = vmatprep.subr.bf16.mxu0 %v377
    %524 = vmatpush2.bf16.msra.mxu0 %v376
    %525 = vmatprep.mubr.bf16.mxu0 %v86
    %526 = vmatmul.mubr.bf16.gmra.mxu0 %v85
    %v527 = vpop.f32.mrf.mxu0
    %v528 = vadd.f32 %v476, %v527
    %v529 = vpop.f32.mrf.mxu0
    %v530 = vadd.f32 %v480, %v529
    %v531 = vpop.f32.mrf.mxu0
    %v532 = vpop.f32.mrf.mxu0
    %533 = vdwg.mxu0
    %534 = vmatprep.subr.bf16.mxu0 %v375
    %535 = vmatpush1.bf16.msra.mxu0 %v374
    %536 = vmatprep.subr.bf16.mxu0 %v371
    %537 = vmatpush1.bf16.msra.mxu0 %v370
    %538 = vmatprep.subr.bf16.mxu0 %v367
    %539 = vmatpush1.bf16.msra.mxu0 %v366
    %540 = vmatprep.subr.bf16.mxu0 %v363
    %541 = vmatpush1.bf16.msra.mxu0 %v362
    %542 = vmatprep.subr.bf16.mxu0 %v359
    %543 = vmatpush1.bf16.msra.mxu0 %v358
    %544 = vmatprep.subr.bf16.mxu0 %v355
    %545 = vmatpush1.bf16.msra.mxu0 %v354
    %546 = vmatprep.subr.bf16.mxu0 %v351
    %547 = vmatpush1.bf16.msra.mxu0 %v350
    %548 = vmatprep.subr.bf16.mxu0 %v347
    %549 = vmatpush1.bf16.msra.mxu0 %v346
    %550 = vmatprep.subr.bf16.mxu0 %v407
    %551 = vmatpush2.bf16.msra.mxu0 %v406
    %552 = vmatprep.subr.bf16.mxu0 %v403
    %553 = vmatpush2.bf16.msra.mxu0 %v402
    %554 = vmatprep.subr.bf16.mxu0 %v399
    %555 = vmatpush2.bf16.msra.mxu0 %v398
    %556 = vmatprep.subr.bf16.mxu0 %v395
    %557 = vmatpush2.bf16.msra.mxu0 %v394
    %558 = vmatprep.subr.bf16.mxu0 %v391
    %559 = vmatpush2.bf16.msra.mxu0 %v390
    %560 = vmatprep.subr.bf16.mxu0 %v387
    %561 = vmatpush2.bf16.msra.mxu0 %v386
    %562 = vmatprep.subr.bf16.mxu0 %v383
    %563 = vmatpush2.bf16.msra.mxu0 %v382
    %564 = vmatprep.subr.bf16.mxu0 %v379
    %565 = vmatpush2.bf16.msra.mxu0 %v378
    %566 = vmatprep.mubr.bf16.mxu0 %v86
    %567 = vmatmul.mubr.bf16.gmra.mxu0 %v85
    %v568 = vpop.f32.mrf.mxu0
    %v569 = vadd.f32 %v484, %v568
    %v570 = vpop.f32.mrf.mxu0
    %v571 = vadd.f32 %v488, %v570
    %v572 = vpop.f32.mrf.mxu0
    %v573 = vpop.f32.mrf.mxu0
    %574 = vdwg.mxu0
    %v575 = vmul.f32 %v528, 5.0
    %v576 = vmul.f32 %v530, 5.0
    %v577 = vmul.f32 %v569, 5.0
    %v578 = vmul.f32 %v571, 5.0
    %v579 = vmin.f32 %v575, 20.0
    %v580 = vmin.f32 %v576, 20.0
    %v581 = vmin.f32 %v577, 20.0
    %v582 = vmin.f32 %v578, 20.0
    %vm583 = vcmp.gt.f32.partialorder %v575, 20.0
    %vm584 = vcmp.gt.f32.partialorder %v576, 20.0
    %vm585 = vcmp.gt.f32.partialorder %v577, 20.0
    %vm586 = vcmp.gt.f32.partialorder %v578, 20.0
    %v587 = vmul.f32 %v579, 1.442695
    %v588 = vpow.pop %v587
    %v589 = vmul.f32 %v580, 1.442695
    %v590 = vpow.pop %v589
    %v591 = vmul.f32 %v581, 1.442695
    %v592 = vpow.pop %v591
    %v593 = vmul.f32 %v582, 1.442695
    %v594 = vpow.pop %v593
    %v595 = vadd.f32 %v588, 1.0
    %v596 = vlog2.pop %v595
    %v597 = vmul.f32 %v596, 0.6931472
    %v598 = vmul.f32 -0.5, %v588
    %v599 = vadd.f32 %v598, 1.0
    %v600 = vmul.f32 %v599, %v588
    %v601 = vand.u32 2147483647, %v588
    %vm602 = vcmp.lt.f32.partialorder %v601, 0.0004427343
    %v603 = vsel %vm602, %v600, %v597
    %v604 = vadd.f32 %v590, 1.0
    %v605 = vlog2.pop %v604
    %v606 = vmul.f32 %v605, 0.6931472
    %v607 = vmul.f32 -0.5, %v590
    %v608 = vadd.f32 %v607, 1.0
    %v609 = vmul.f32 %v608, %v590
    %v610 = vand.u32 2147483647, %v590
    %vm611 = vcmp.lt.f32.partialorder %v610, 0.0004427343
    %v612 = vsel %vm611, %v609, %v606
    %v613 = vadd.f32 %v592, 1.0
    %v614 = vlog2.pop %v613
    %v615 = vmul.f32 %v614, 0.6931472
    %v616 = vmul.f32 -0.5, %v592
    %v617 = vadd.f32 %v616, 1.0
    %v618 = vmul.f32 %v617, %v592
    %v619 = vand.u32 2147483647, %v592
    %vm620 = vcmp.lt.f32.partialorder %v619, 0.0004427343
    %v621 = vsel %vm620, %v618, %v615
    %v622 = vadd.f32 %v594, 1.0
    %v623 = vlog2.pop %v622
    %v624 = vmul.f32 %v623, 0.6931472
    %v625 = vmul.f32 -0.5, %v594
    %v626 = vadd.f32 %v625, 1.0
    %v627 = vmul.f32 %v626, %v594
    %v628 = vand.u32 2147483647, %v594
    %vm629 = vcmp.lt.f32.partialorder %v628, 0.0004427343
    %v630 = vsel %vm629, %v627, %v624
    %v631 = vmul.f32 %v603, 0.2
    %v632 = vmul.f32 %v612, 0.2
    %v633 = vmul.f32 %v621, 0.2
    %v634 = vmul.f32 %v630, 0.2
    %v635 = vsel %vm583, %v528, %v631
    %v636 = vsel %vm584, %v530, %v632
    %v637 = vsel %vm585, %v569, %v633
    %v638 = vsel %vm586, %v571, %v634
    %v639 = vpack.c.bf16 %v635, %v635
    %v640 = vpack.c.bf16 %v636, %v636
    %v641 = vpack.c.bf16 %v637, %v637
    %v642 = vpack.c.bf16 %v638, %v638
    %v643 = vld [vmem:[#allocation8] sm:$0xf]
    %v644 = vld [vmem:[#allocation8 + $0x4] sm:$0xf]
    %v645 = vld [vmem:[#allocation8 + $0x8] sm:$0xf]
    %v646 = vld [vmem:[#allocation8 + $0xc] sm:$0xf]
    %v647 = vld [vmem:[#allocation8 + $0x10] sm:$0xf]
    %v648 = vld [vmem:[#allocation8 + $0x14] sm:$0xf]
    %v649 = vld [vmem:[#allocation8 + $0x18] sm:$0xf]
    %v650 = vld [vmem:[#allocation8 + $0x1c] sm:$0xf]
    %v651 = vld [vmem:[#allocation8 + $0x20] sm:$0xf]
    %v652 = vld [vmem:[#allocation8 + $0x24] sm:$0xf]
    %v653 = vld [vmem:[#allocation8 + $0x28] sm:$0xf]
    %v654 = vld [vmem:[#allocation8 + $0x2c] sm:$0xf]
    %v655 = vld [vmem:[#allocation8 + $0x30] sm:$0xf]
    %v656 = vld [vmem:[#allocation8 + $0x34] sm:$0xf]
    %v657 = vld [vmem:[#allocation8 + $0x38] sm:$0xf]
    %v658 = vld [vmem:[#allocation8 + $0x3c] sm:$0xf]
    %v659 = vld [vmem:[#allocation8 + $0x40] sm:$0xf]
    %v660 = vld [vmem:[#allocation8 + $0x44] sm:$0xf]
    %v661 = vld [vmem:[#allocation8 + $0x48] sm:$0xf]
    %v662 = vld [vmem:[#allocation8 + $0x4c] sm:$0xf]
    %v663 = vld [vmem:[#allocation8 + $0x50] sm:$0xf]
    %v664 = vld [vmem:[#allocation8 + $0x54] sm:$0xf]
    %v665 = vld [vmem:[#allocation8 + $0x58] sm:$0xf]
    %v666 = vld [vmem:[#allocation8 + $0x5c] sm:$0xf]
    %v667 = vld [vmem:[#allocation8 + $0x60] sm:$0xf]
    %v668 = vld [vmem:[#allocation8 + $0x64] sm:$0xf]
    %v669 = vld [vmem:[#allocation8 + $0x68] sm:$0xf]
    %v670 = vld [vmem:[#allocation8 + $0x6c] sm:$0xf]
    %v671 = vld [vmem:[#allocation8 + $0x70] sm:$0xf]
    %v672 = vld [vmem:[#allocation8 + $0x74] sm:$0xf]
    %v673 = vld [vmem:[#allocation8 + $0x78] sm:$0xf]
    %v674 = vld [vmem:[#allocation8 + $0x7c] sm:$0xf]
    %v675 = vld [vmem:[#allocation8 + $0x80] sm:$0xf]
    %v676 = vld [vmem:[#allocation8 + $0x84] sm:$0xf]
    %v677 = vld [vmem:[#allocation8 + $0x88] sm:$0xf]
    %v678 = vld [vmem:[#allocation8 + $0x8c] sm:$0xf]
    %v679 = vld [vmem:[#allocation8 + $0x90] sm:$0xf]
    %v680 = vld [vmem:[#allocation8 + $0x94] sm:$0xf]
    %v681 = vld [vmem:[#allocation8 + $0x98] sm:$0xf]
    %v682 = vld [vmem:[#allocation8 + $0x9c] sm:$0xf]
    %v683 = vld [vmem:[#allocation8 + $0xa0] sm:$0xf]
    %v684 = vld [vmem:[#allocation8 + $0xa4] sm:$0xf]
    %v685 = vld [vmem:[#allocation8 + $0xa8] sm:$0xf]
    %v686 = vld [vmem:[#allocation8 + $0xac] sm:$0xf]
    %v687 = vld [vmem:[#allocation8 + $0xb0] sm:$0xf]
    %v688 = vld [vmem:[#allocation8 + $0xb4] sm:$0xf]
    %v689 = vld [vmem:[#allocation8 + $0xb8] sm:$0xf]
    %v690 = vld [vmem:[#allocation8 + $0xbc] sm:$0xf]
    %v691 = vld [vmem:[#allocation8 + $0xc0] sm:$0xf]
    %v692 = vld [vmem:[#allocation8 + $0xc4] sm:$0xf]
    %v693 = vld [vmem:[#allocation8 + $0xc8] sm:$0xf]
    %v694 = vld [vmem:[#allocation8 + $0xcc] sm:$0xf]
    %v695 = vld [vmem:[#allocation8 + $0xd0] sm:$0xf]
    %v696 = vld [vmem:[#allocation8 + $0xd4] sm:$0xf]
    %v697 = vld [vmem:[#allocation8 + $0xd8] sm:$0xf]
    %v698 = vld [vmem:[#allocation8 + $0xdc] sm:$0xf]
    %v699 = vld [vmem:[#allocation8 + $0xe0] sm:$0xf]
    %v700 = vld [vmem:[#allocation8 + $0xe4] sm:$0xf]
    %v701 = vld [vmem:[#allocation8 + $0xe8] sm:$0xf]
    %v702 = vld [vmem:[#allocation8 + $0xec] sm:$0xf]
    %v703 = vld [vmem:[#allocation8 + $0xf0] sm:$0xf]
    %v704 = vld [vmem:[#allocation8 + $0xf4] sm:$0xf]
    %v705 = vld [vmem:[#allocation8 + $0xf8] sm:$0xf]
    %v706 = vld [vmem:[#allocation8 + $0xfc] sm:$0xf]
    %v707 = vld [vmem:[%s4] sm:$0x1]
    %v772 = vunpack.c.l.b16 %v643
    %v773 = vunpack.c.l.b16 %v644
    %v774 = vunpack.c.l.b16 %v645
    %v775 = vunpack.c.l.b16 %v646
    %v776 = vunpack.c.l.b16 %v647
    %v777 = vunpack.c.l.b16 %v648
    %v778 = vunpack.c.l.b16 %v649
    %v779 = vunpack.c.l.b16 %v650
    %v780 = vunpack.c.l.b16 %v651
    %v781 = vunpack.c.l.b16 %v652
    %v782 = vunpack.c.l.b16 %v653
    %v783 = vunpack.c.l.b16 %v654
    %v784 = vunpack.c.l.b16 %v655
    %v785 = vunpack.c.l.b16 %v656
    %v786 = vunpack.c.l.b16 %v657
    %v787 = vunpack.c.l.b16 %v658
    %v788 = vunpack.c.l.b16 %v659
    %v789 = vunpack.c.l.b16 %v660
    %v790 = vunpack.c.l.b16 %v661
    %v791 = vunpack.c.l.b16 %v662
    %v792 = vunpack.c.l.b16 %v663
    %v793 = vunpack.c.l.b16 %v664
    %v794 = vunpack.c.l.b16 %v665
    %v795 = vunpack.c.l.b16 %v666
    %v796 = vunpack.c.l.b16 %v667
    %v797 = vunpack.c.l.b16 %v668
    %v798 = vunpack.c.l.b16 %v669
    %v799 = vunpack.c.l.b16 %v670
    %v800 = vunpack.c.l.b16 %v671
    %v801 = vunpack.c.l.b16 %v672
    %v802 = vunpack.c.l.b16 %v673
    %v803 = vunpack.c.l.b16 %v674
    %v804 = vunpack.c.l.b16 %v675
    %v805 = vunpack.c.l.b16 %v676
    %v806 = vunpack.c.l.b16 %v677
    %v807 = vunpack.c.l.b16 %v678
    %v808 = vunpack.c.l.b16 %v679
    %v809 = vunpack.c.l.b16 %v680
    %v810 = vunpack.c.l.b16 %v681
    %v811 = vunpack.c.l.b16 %v682
    %v812 = vunpack.c.l.b16 %v683
    %v813 = vunpack.c.l.b16 %v684
    %v814 = vunpack.c.l.b16 %v685
    %v815 = vunpack.c.l.b16 %v686
    %v816 = vunpack.c.l.b16 %v687
    %v817 = vunpack.c.l.b16 %v688
    %v818 = vunpack.c.l.b16 %v689
    %v819 = vunpack.c.l.b16 %v690
    %v820 = vunpack.c.l.b16 %v691
    %v821 = vunpack.c.l.b16 %v692
    %v822 = vunpack.c.l.b16 %v693
    %v823 = vunpack.c.l.b16 %v694
    %v824 = vunpack.c.l.b16 %v695
    %v825 = vunpack.c.l.b16 %v696
    %v826 = vunpack.c.l.b16 %v697
    %v827 = vunpack.c.l.b16 %v698
    %v828 = vunpack.c.l.b16 %v699
    %v829 = vunpack.c.l.b16 %v700
    %v830 = vunpack.c.l.b16 %v701
    %v831 = vunpack.c.l.b16 %v702
    %v832 = vunpack.c.l.b16 %v703
    %v833 = vunpack.c.l.b16 %v704
    %v834 = vunpack.c.l.b16 %v705
    %v835 = vunpack.c.l.b16 %v706
    %v836 = vpack.c.b16 %v773, %v772
    %v837 = vpack.c.b16 %v775, %v774
    %v838 = vpack.c.b16 %v777, %v776
    %v839 = vpack.c.b16 %v779, %v778
    %v840 = vpack.c.b16 %v781, %v780
    %v841 = vpack.c.b16 %v783, %v782
    %v842 = vpack.c.b16 %v785, %v784
    %v843 = vpack.c.b16 %v787, %v786
    %v844 = vpack.c.b16 %v789, %v788
    %v845 = vpack.c.b16 %v791, %v790
    %v846 = vpack.c.b16 %v793, %v792
    %v847 = vpack.c.b16 %v795, %v794
    %v848 = vpack.c.b16 %v797, %v796
    %v849 = vpack.c.b16 %v799, %v798
    %v850 = vpack.c.b16 %v801, %v800
    %v851 = vpack.c.b16 %v803, %v802
    %v852 = vpack.c.b16 %v805, %v804
    %v853 = vpack.c.b16 %v807, %v806
    %v854 = vpack.c.b16 %v809, %v808
    %v855 = vpack.c.b16 %v811, %v810
    %v856 = vpack.c.b16 %v813, %v812
    %v857 = vpack.c.b16 %v815, %v814
    %v858 = vpack.c.b16 %v817, %v816
    %v859 = vpack.c.b16 %v819, %v818
    %v860 = vpack.c.b16 %v821, %v820
    %v861 = vpack.c.b16 %v823, %v822
    %v862 = vpack.c.b16 %v825, %v824
    %v863 = vpack.c.b16 %v827, %v826
    %v864 = vpack.c.b16 %v829, %v828
    %v865 = vpack.c.b16 %v831, %v830
    %v866 = vpack.c.b16 %v833, %v832
    %v867 = vpack.c.b16 %v835, %v834
    %900 = vmatprep.subr.bf16.mxu0 0
    %901 = vmatpush1.bf16.msra.mxu0 %v843
    %902 = vmatprep.subr.bf16.mxu0 0
    %903 = vmatpush1.bf16.msra.mxu0 %v842
    %904 = vmatprep.subr.bf16.mxu0 0
    %905 = vmatpush1.bf16.msra.mxu0 %v841
    %906 = vmatprep.subr.bf16.mxu0 0
    %907 = vmatpush1.bf16.msra.mxu0 %v840
    %908 = vmatprep.subr.bf16.mxu0 0
    %909 = vmatpush1.bf16.msra.mxu0 %v839
    %910 = vmatprep.subr.bf16.mxu0 0
    %911 = vmatpush1.bf16.msra.mxu0 %v838
    %912 = vmatprep.subr.bf16.mxu0 0
    %913 = vmatpush1.bf16.msra.mxu0 %v837
    %914 = vmatprep.subr.bf16.mxu0 0
    %915 = vmatpush1.bf16.msra.mxu0 %v836
    %916 = vmatprep.subr.bf16.mxu0 0
    %917 = vmatpush2.bf16.msra.mxu0 %v851
    %918 = vmatprep.subr.bf16.mxu0 0
    %919 = vmatpush2.bf16.msra.mxu0 %v850
    %920 = vmatprep.subr.bf16.mxu0 0
    %921 = vmatpush2.bf16.msra.mxu0 %v849
    %922 = vmatprep.subr.bf16.mxu0 0
    %923 = vmatpush2.bf16.msra.mxu0 %v848
    %924 = vmatprep.subr.bf16.mxu0 0
    %925 = vmatpush2.bf16.msra.mxu0 %v847
    %926 = vmatprep.subr.bf16.mxu0 0
    %927 = vmatpush2.bf16.msra.mxu0 %v846
    %928 = vmatprep.subr.bf16.mxu0 0
    %929 = vmatpush2.bf16.msra.mxu0 %v845
    %930 = vmatprep.subr.bf16.mxu0 0
    %931 = vmatpush2.bf16.msra.mxu0 %v844
    %932 = vmatprep.mubr.bf16.mxu0 %v640
    %933 = vmatmul.mubr.bf16.gmra.mxu0 %v639
    %v934 = vpop.f32.mrf.mxu0
    %v935 = vadd.f32 %v707, %v934
    %v936 = vpop.f32.mrf.mxu0
    %v937 = vpop.f32.mrf.mxu0
    %v938 = vpop.f32.mrf.mxu0
    %939 = vdwg.mxu0
    %940 = vmatprep.subr.bf16.mxu0 0
    %941 = vmatpush1.bf16.msra.mxu0 %v859
    %942 = vmatprep.subr.bf16.mxu0 0
    %943 = vmatpush1.bf16.msra.mxu0 %v858
    %944 = vmatprep.subr.bf16.mxu0 0
    %945 = vmatpush1.bf16.msra.mxu0 %v857
    %946 = vmatprep.subr.bf16.mxu0 0
    %947 = vmatpush1.bf16.msra.mxu0 %v856
    %948 = vmatprep.subr.bf16.mxu0 0
    %949 = vmatpush1.bf16.msra.mxu0 %v855
    %950 = vmatprep.subr.bf16.mxu0 0
    %951 = vmatpush1.bf16.msra.mxu0 %v854
    %952 = vmatprep.subr.bf16.mxu0 0
    %953 = vmatpush1.bf16.msra.mxu0 %v853
    %954 = vmatprep.subr.bf16.mxu0 0
    %955 = vmatpush1.bf16.msra.mxu0 %v852
    %956 = vmatprep.subr.bf16.mxu0 0
    %957 = vmatpush2.bf16.msra.mxu0 %v867
    %958 = vmatprep.subr.bf16.mxu0 0
    %959 = vmatpush2.bf16.msra.mxu0 %v866
    %960 = vmatprep.subr.bf16.mxu0 0
    %961 = vmatpush2.bf16.msra.mxu0 %v865
    %962 = vmatprep.subr.bf16.mxu0 0
    %963 = vmatpush2.bf16.msra.mxu0 %v864
    %964 = vmatprep.subr.bf16.mxu0 0
    %965 = vmatpush2.bf16.msra.mxu0 %v863
    %966 = vmatprep.subr.bf16.mxu0 0
    %967 = vmatpush2.bf16.msra.mxu0 %v862
    %968 = vmatprep.subr.bf16.mxu0 0
    %969 = vmatpush2.bf16.msra.mxu0 %v861
    %970 = vmatprep.subr.bf16.mxu0 0
    %971 = vmatpush2.bf16.msra.mxu0 %v860
    %972 = vmatprep.mubr.bf16.mxu0 %v642
    %973 = vmatmul.mubr.bf16.gmra.mxu0 %v641
    %v974 = vpop.f32.mrf.mxu0
    %v975 = vadd.f32 %v935, %v974
    %v976 = vpop.f32.mrf.mxu0
    %v977 = vpop.f32.mrf.mxu0
    %v978 = vpop.f32.mrf.mxu0
    %979 = vdwg.mxu0
    %980 = vst [vmem:[#allocation10] sm:$0x1] %v975
    // Predicated region
    $region38: #{tpu_custom_call.1} parent=1 // pred_check
      _
    $region39: #{tpu_custom_call.1} parent=1 // pred_check_branch
      %982 = sbr.rel (0) target = $region41
    $region40: #{tpu_custom_call.1} parent=1 // pred_region
      %s984 = ssub.s32 16, 16
      %985 = vsyncadd [#allocation4], %s984
      %s987 = sshll.u32 [#allocation10], 4
      %s988 = int_to_ptr.vmem [resolvable:$true] %s987
      %990 = dma.vmem_to_hbm [thread:$0]  %s988, 16, %s5, [#allocation4]
    $region41: #{tpu_custom_call.1} parent=1 // pred_fallthru
      _
    // Predicated region
    $region42: #{tpu_custom_call.1} parent=1 // pred_check
      _
    $region43: #{tpu_custom_call.1} parent=1 // pred_check_branch
      %992 = sbr.rel (0) target = $region45
    $region44: #{tpu_custom_call.1} parent=1 // pred_region
      %993 = dma.done [#allocation4], 16
    $region45: #{tpu_custom_call.1} parent=1 // pred_fallthru
      _
    %994 = vsyncpa [#allocation3], 1
    %995 = vsyncpa [#allocation6], 1
    %996 = vsyncpa [#allocation9], 1
    %997 = vsyncpa [#allocation4], 1

</llo_original>
